<compile_context>
chip_gen: v7x
topology: tpu7x:2x2x1
jax: 0.10.0
libtpu: 0.0.40
codegen_flags: <defaults>
</compile_context>

<pallas_src>
import functools

import jax
import jax.numpy as jnp
from jax import lax
from jax.experimental import pallas as pl
from jax.experimental.pallas import tpu as pltpu


_MAX_TILE_ROWS = 8192


# ----------------------------------------------------------------------------
# Tile sizing helpers (generation aware).
# ----------------------------------------------------------------------------
def _vmem_capacity_bytes():
    try:
        info = pltpu.get_tpu_info()
        cap = getattr(info, "vmem_capacity_bytes", None)
        if cap:
            return int(cap)
    except Exception:
        pass
    return 64 * 1024 * 1024  # conservative (v7x-level) default


def _bytes_per_row(c, logit_bytes):
    """Approx VMEM bytes per tile row: double-buffered input blocks plus the
    lane-padded f32 intermediates the elementwise chain materializes."""
    padded_c = max(c, 128)                       # lanes pad to 128 in VMEM
    return (2 * (c * logit_bytes + 4)            # logits + int32 target blocks (x2 buffers)
            + 6 * padded_c * 4                   # full-width f32 temps (cast/exp/mask/selects)
            + 8 * 512)                           # skinny (T,1) f32 temps, lane padded


def _select_tile_n(n, c, logit_bytes):
    """Rows per block: target ~1-2 MiB of streamed logits per grid step, bounded
    so everything fits the generation-aware VMEM budget."""
    cap = _vmem_capacity_bytes()
    budget = min(max(cap // 2 - (8 << 20), 16 << 20), 40 << 20)
    target = (2 << 20) // max(c * logit_bytes, 1)          # rows for ~2 MiB logits
    tile = min(budget // _bytes_per_row(c, logit_bytes),
               max(target, 256), _MAX_TILE_ROWS)
    tile = max(128, (tile // 128) * 128)                   # lane/sublane aligned
    if n <= tile:
        return n                                           # one block covers the batch
    return int(tile)


def _vmem_limit_bytes(tile_n, c, logit_bytes):
    cap = _vmem_capacity_bytes()
    need = tile_n * _bytes_per_row(c, logit_bytes) + (4 << 20)
    hi = min(cap - (12 << 20), 52 << 20)                   # headroom on v7x's 64 MiB
    return int(max(24 << 20, min(hi, need)))


# ----------------------------------------------------------------------------
# In-kernel per-row focal loss.
# ----------------------------------------------------------------------------
def _per_row_focal(x, t, w, alpha, gamma):
    """x: (T, C) logits, t: (T, 1) int32 targets, w: (1, C) f32 weights or None."""
    x = x.astype(jnp.float32)

    # numerically stable log-sum-exp over the class (lane) axis
    m = jnp.max(x, axis=-1, keepdims=True)
    # TODO(synk): on v6e/v7x the exp could run in bf16 on the EUP (~2x transcendental
    #             throughput) while keeping the lane-sum/lse in f32; kept f32 here.
    lse = m + jnp.log(jnp.sum(jnp.exp(x - m), axis=-1, keepdims=True))     # (T, 1)

    # select-based gather of the target logit (and per-class weight)
    col = lax.broadcasted_iota(jnp.int32, x.shape, 1)                      # (T, C)
    hit = col == t                                                         # (T, C)
    x_t = jnp.sum(jnp.where(hit, x, 0.0), axis=-1, keepdims=True)          # (T, 1)

    # F.cross_entropy(..., weight=w, reduction='none') = w[y] * (lse - x[y])
    ce = lse - x_t
    if w is not None:
        w_t = jnp.sum(jnp.where(hit, w, 0.0), axis=-1, keepdims=True)      # (T, 1)
        ce = w_t * ce

    # NOTE: pt = exp(-ce) deliberately includes the class weight — this matches
    # the reference PyTorch module (pt = exp(-w[y]*nll)), not the textbook form.
    pt = jnp.exp(-ce)
    omp = 1.0 - pt

    g = float(gamma)
    if g == 0.0:
        mod = jnp.ones_like(omp)
    elif g == float(int(g)) and 0 < int(g) <= 8:
        mod = omp
        for _ in range(int(g) - 1):            # integer gamma: repeated multiply
            mod = mod * omp
    else:
        # general float gamma; clamp avoids log(0) inside the pow lowering
        mod = jnp.power(jnp.maximum(omp, 1e-30), g)

    return alpha * mod * ce                                                # (T, 1)


# ----------------------------------------------------------------------------
# Kernels.
# ----------------------------------------------------------------------------
def _focal_sum_kernel(*refs, alpha, gamma, n_rows, tile_n, tiles_per_split,
                      scale, need_mask, has_weights):
    if has_weights:
        logits_ref, targets_ref, w_ref, out_ref, acc_ref = refs
        w = w_ref[...]
    else:
        logits_ref, targets_ref, out_ref, acc_ref = refs
        w = None

    i = pl.program_id(0)   # split axis ("parallel": sharded across TCs on v7x)
    j = pl.program_id(1)   # tile axis within the split ("arbitrary": accumulator)

    @pl.when(j == 0)
    def _init():
        acc_ref[...] = jnp.zeros_like(acc_ref)

    focal = _per_row_focal(logits_ref[...], targets_ref[...], w, alpha, gamma)

    if need_mask:
        # Static flag: only emitted for ragged shapes / padded splits.  Uses the
        # *logical* (pre-clamp) block index, so a clamped duplicate block is
        # fully masked and cannot double-count.
        block = i * tiles_per_split + j
        local = lax.broadcasted_iota(jnp.int32, focal.shape, 0)
        valid = (block * tile_n + local) < n_rows
        focal = jnp.where(valid, focal, 0.0)

    acc_ref[...] += jnp.sum(focal, axis=0, keepdims=True)                  # (1, 1)

    @pl.when(j == pl.num_programs(1) - 1)
    def _finalize():
        out_ref[...] = jnp.broadcast_to(acc_ref[...] * scale, out_ref.shape)


def _focal_none_dense_kernel(*refs, alpha, gamma, has_weights):
    if has_weights:
        logits_ref, targets_ref, w_ref, out_ref = refs
        w = w_ref[...]
    else:
        logits_ref, targets_ref, out_ref = refs
        w = None
    focal = _per_row_focal(logits_ref[...], targets_ref[...], w, alpha, gamma)
    # lane-dense store: (T, 1) -> (1, T) so writeback uses full 128-lane stores
    out_ref[...] = focal.reshape(out_ref.shape)


def _focal_none_skinny_kernel(*refs, alpha, gamma, has_weights):
    if has_weights:
        logits_ref, targets_ref, w_ref, out_ref = refs
        w = w_ref[...]
    else:
        logits_ref, targets_ref, out_ref = refs
        w = None
    out_ref[...] = _per_row_focal(logits_ref[...], targets_ref[...], w, alpha, gamma)


# ----------------------------------------------------------------------------
# Wrapper.
# ----------------------------------------------------------------------------
def focal_loss(logits, targets, class_weights=None, *, alpha: float = 1.0,
               gamma: float = 2.0, reduction: str = "mean", block_rows=None):
    """Pallas implementation of FocalLoss.forward for (N, C) logits.

    `block_rows` optionally overrides the auto-selected rows-per-block (for
    testing / manual tuning; should be a multiple of 128 when it tiles N).
    reduction='mean' divides by N (torch.mean of per-sample losses), matching
    the module, not F.cross_entropy's weight-sum normalization.
    """
    logits = jnp.asarray(logits)
    if jnp.dtype(logits.dtype) not in (jnp.dtype(jnp.float32),
                                       jnp.dtype(jnp.bfloat16)):
        logits = logits.astype(jnp.float32)
    n, c = logits.shape

    t2d = jnp.asarray(targets, jnp.int32).reshape(n, 1)
    has_weights = class_weights is not None
    if has_weights:
        w2d = jnp.asarray(class_weights, jnp.float32).reshape(1, c)

    logit_bytes = jnp.dtype(logits.dtype).itemsize
    tile_n = int(block_rows) if block_rows else _select_tile_n(n, c, logit_bytes)
    tile_n = max(1, min(tile_n, n))
    num_tiles = -(-n // tile_n)
    vmem_limit = _vmem_limit_bytes(tile_n, c, logit_bytes)

    if reduction in ("mean", "sum"):
        # Unconditional 2-way "parallel" split: v7x's two TensorCores each stream
        # ~half the tiles; on 1-TC chips (v5e/v6e) it is just a serial outer loop.
        num_splits = 2 if num_tiles >= 2 else 1
        tiles_per_split = -(-num_tiles // num_splits)
        padded_tiles = num_splits * tiles_per_split
        need_mask = (n % tile_n != 0) or (padded_tiles != num_tiles)
        scale = (1.0 / float(n)) if reduction == "mean" else 1.0

        def row_block(i, j):
            blk = i * tiles_per_split + j
            if padded_tiles != num_tiles:     # clamp padded blocks (masked in-kernel)
                blk = jnp.minimum(blk, num_tiles - 1)
            return (blk, 0)

        in_specs = [pl.BlockSpec((tile_n, c), row_block),       # logits tile
                    pl.BlockSpec((tile_n, 1), row_block)]       # targets tile
        operands = [logits, t2d]
        if has_weights:
            in_specs.append(pl.BlockSpec((1, c), lambda i, j: (0, 0)))
            operands.append(w2d)

        kernel = functools.partial(
            _focal_sum_kernel, alpha=float(alpha), gamma=float(gamma),
            n_rows=n, tile_n=tile_n, tiles_per_split=tiles_per_split,
            scale=float(scale), need_mask=need_mask, has_weights=has_weights)

        out = pl.pallas_call(
            kernel,
            out_shape=jax.ShapeDtypeStruct((num_splits * 8, 128), jnp.float32),
            grid_spec=pltpu.PrefetchScalarGridSpec(
                num_scalar_prefetch=0,
                grid=(num_splits, tiles_per_split),
                in_specs=in_specs,
                out_specs=pl.BlockSpec((8, 128), lambda i, j: (i, 0)),
                scratch_shapes=[pltpu.VMEM((1, 1), jnp.float32)]),
            compiler_params=pltpu.CompilerParams(
                dimension_semantics=("parallel", "arbitrary"),
                vmem_limit_bytes=vmem_limit),
        )(*operands)
        # One partial per split (first row of each (8,128) slab); sum outside.
        return jnp.sum(out[::8, 0])

    if reduction == "none":
        in_specs = [pl.BlockSpec((tile_n, c), lambda i: (i, 0)),
                    pl.BlockSpec((tile_n, 1), lambda i: (i, 0))]
        operands = [logits, t2d]
        if has_weights:
            in_specs.append(pl.BlockSpec((1, c), lambda i: (0, 0)))
            operands.append(w2d)

        lane_dense = (num_tiles > 1) and (tile_n % 128 == 0)
        if lane_dense:
            kernel = functools.partial(_focal_none_dense_kernel, alpha=float(alpha),
                                       gamma=float(gamma), has_weights=has_weights)
            out_shape = jax.ShapeDtypeStruct((num_tiles, tile_n), jnp.float32)
            out_spec = pl.BlockSpec((1, tile_n), lambda i: (i, 0))
        else:
            kernel = functools.partial(_focal_none_skinny_kernel, alpha=float(alpha),
                                       gamma=float(gamma), has_weights=has_weights)
            out_shape = jax.ShapeDtypeStruct((num_tiles * tile_n, 1), jnp.float32)
            out_spec = pl.BlockSpec((tile_n, 1), lambda i: (i, 0))

        out = pl.pallas_call(
            kernel,
            out_shape=out_shape,
            grid_spec=pltpu.PrefetchScalarGridSpec(
                num_scalar_prefetch=0,
                grid=(num_tiles,),
                in_specs=in_specs,
                out_specs=out_spec),
            compiler_params=pltpu.CompilerParams(
                dimension_semantics=("parallel",),
                vmem_limit_bytes=vmem_limit),
        )(*operands)
        # Padding rows (ragged final tile) hold garbage; drop them.
        return out.reshape(num_tiles * tile_n)[:n]

    raise ValueError(f"Unsupported reduction: {reduction!r}")


# ----------------------------------------------------------------------------
# Pure-JAX reference mirroring the PyTorch module.
# ----------------------------------------------------------------------------
def _focal_loss_ref(logits, targets, class_weights, alpha, gamma, reduction):
    logits = logits.astype(jnp.float32)
    logp = jax.nn.log_softmax(logits, axis=-1)
    n, c = logits.shape
    nll = -logp[jnp.arange(n), targets]
    w = (jnp.ones((c,), jnp.float32) if class_weights is None
         else jnp.asarray(class_weights, jnp.float32))
    ce = w[targets] * nll
    pt = jnp.exp(-ce)
    focal = alpha * (1.0 - pt) ** gamma * ce
    if reduction == "mean":
        return jnp.mean(focal)
    if reduction == "sum":
        return jnp.sum(focal)
    return focal


if __name__ == "__main__":
    key = jax.random.PRNGKey(0)
    k1, k2 = jax.random.split(key)

    # Small shapes: (N, C) logits + (N,) int targets.
    N, C = 24, 16
    logits = jax.random.normal(k1, (N, C), dtype=jnp.float32) * 2.0
    targets = jax.random.randint(k2, (N,), 0, C, dtype=jnp.int32)
    cw = jnp.linspace(0.5, 1.5, C, dtype=jnp.float32)

    # Single-block paths, with and without class weights.
    for reduction in ("mean", "sum", "none"):
        for weights in (cw, None):
            out = jax.block_until_ready(
                focal_loss(logits, targets, weights,
                           alpha=1.0, gamma=2.0, reduction=reduction))
            ref = _focal_loss_ref(logits, targets, weights, 1.0, 2.0, reduction)
            assert jnp.allclose(out, ref, atol=1e-4, rtol=1e-5), \
                (reduction, weights is None, out, ref)

    # Multi-tile / ragged / clamped-2-way-split / lane-dense paths, exercised on
    # small data by forcing 128-row blocks (3 tiles for N=300, one padded block).
    N2 = 300
    k3, k4 = jax.random.split(k1)
    logits2 = jax.random.normal(k3, (N2, C), dtype=jnp.float32)
    targets2 = jax.random.randint(k4, (N2,), 0, C, dtype=jnp.int32)
    for reduction in ("mean", "sum", "none"):
        out = jax.block_until_ready(
            focal_loss(logits2, targets2, cw,
                       alpha=0.75, gamma=2.0, reduction=reduction, block_rows=128))
        ref = _focal_loss_ref(logits2, targets2, cw, 0.75, 2.0, reduction)
        assert jnp.allclose(out, ref, atol=1e-4, rtol=1e-5), (reduction, out, ref)

    # bf16 logits path (halves HBM traffic); reference on the same rounded values.
    logits_bf16 = logits.astype(jnp.bfloat16)
    out_bf = jax.block_until_ready(
        focal_loss(logits_bf16, targets, cw, alpha=1.0, gamma=2.0, reduction="mean"))
    ref_bf = _focal_loss_ref(logits_bf16.astype(jnp.float32), targets, cw,
                             1.0, 2.0, "mean")
    assert jnp.allclose(out_bf, ref_bf, atol=1e-4, rtol=1e-4), (out_bf, ref_bf)

    print("KERNEL_OK")
</pallas_src>

<mosaic_0001>
module attributes {stable_mosaic.version = 11 : i64} {
  func.func @_focal_sum_kernel(%arg0: i32, %arg1: i32, %arg2: memref<24x16xf32, #tpu.memory_space<vmem>>, %arg3: memref<24x1xi32, #tpu.memory_space<vmem>>, %arg4: memref<1x16xf32, #tpu.memory_space<vmem>>, %arg5: memref<8x128xf32, #tpu.memory_space<vmem>>, %arg6: memref<1x1xf32, #tpu.memory_space<vmem>>) attributes {dimension_semantics = [#tpu.dimension_semantics<parallel>, #tpu.dimension_semantics<arbitrary>], iteration_bounds = array<i64: 1, 1>, scalar_prefetch = 0 : i64, scratch_operands = 1 : i64, tpu.core_type = #tpu.core_type<tc>, window_params = [{transform_indices = @transform_0, window_bounds = array<i64: 24, 16>}, {transform_indices = @transform_1, window_bounds = array<i64: 24, 1>}, {pipeline_mode = #tpu.pipeline_mode<synchronous>, transform_indices = @transform_2, window_bounds = array<i64: 1, 16>}, {transform_indices = @transform_3, window_bounds = array<i64: 8, 128>}]} {
    %c0 = arith.constant 0 : index
    %c0_0 = arith.constant 0 : index
    %0 = vector.load %arg4[%c0, %c0_0] : memref<1x16xf32, #tpu.memory_space<vmem>>, vector<1x16xf32>
    %c0_i32 = arith.constant 0 : i32
    %1 = arith.cmpi eq, %arg1, %c0_i32 : i32
    %2 = arith.extui %1 : i1 to i32
    %c0_i32_1 = arith.constant 0 : i32
    %3 = arith.cmpi ne, %2, %c0_i32_1 : i32
    scf.if %3 {
      %cst_21 = arith.constant 0.000000e+00 : f32
      %47 = vector.broadcast %cst_21 : f32 to vector<1x1xf32>
      %c0_22 = arith.constant 0 : index
      %c0_23 = arith.constant 0 : index
      %48 = vector.load %arg6[%c0_22, %c0_23] : memref<1x1xf32, #tpu.memory_space<vmem>>, vector<1x1xf32>
      tpu.vector_store %arg6[%c0_22, %c0_23], %47 {strides = array<i32>} : memref<1x1xf32, #tpu.memory_space<vmem>>, vector<1x1xf32>,
    } else {
    }
    %c0_2 = arith.constant 0 : index
    %c0_3 = arith.constant 0 : index
    %4 = vector.load %arg2[%c0_2, %c0_3] : memref<24x16xf32, #tpu.memory_space<vmem>>, vector<24x16xf32>
    %c0_4 = arith.constant 0 : index
    %c0_5 = arith.constant 0 : index
    %5 = vector.load %arg3[%c0_4, %c0_5] : memref<24x1xi32, #tpu.memory_space<vmem>>, vector<24x1xi32>
    %cst = arith.constant dense<0xFF800000> : vector<24xf32>
    %6 = vector.multi_reduction <maximumf>, %4, %cst [1] : vector<24x16xf32> to vector<24xf32>
    %7 = vector.shape_cast %6 : vector<24xf32> to vector<24x1xf32>
    %8 = vector.broadcast %7 : vector<24x1xf32> to vector<24x16xf32>
    %9 = arith.subf %4, %8 : vector<24x16xf32>
    %10 = math.exp %9 : vector<24x16xf32>
    %cst_6 = arith.constant dense<0.000000e+00> : vector<24xf32>
    %11 = vector.multi_reduction <add>, %10, %cst_6 [1] : vector<24x16xf32> to vector<24xf32>
    %12 = vector.shape_cast %11 : vector<24xf32> to vector<24x1xf32>
    %13 = math.log %12 : vector<24x1xf32>
    %14 = arith.addf %7, %13 : vector<24x1xf32>
    %15 = tpu.iota {dimensions = array<i32: 1>} : vector<24x16xi32>
    %16 = vector.broadcast %5 : vector<24x1xi32> to vector<24x16xi32>
    %17 = arith.cmpi eq, %15, %16 : vector<24x16xi32>
    %cst_7 = arith.constant 0.000000e+00 : f32
    %18 = vector.broadcast %cst_7 : f32 to vector<24x16xf32>
    %19 = arith.select %17, %4, %18 : vector<24x16xi1>, vector<24x16xf32>
    %cst_8 = arith.constant dense<0.000000e+00> : vector<24xf32>
    %20 = vector.multi_reduction <add>, %19, %cst_8 [1] : vector<24x16xf32> to vector<24xf32>
    %21 = vector.shape_cast %20 : vector<24xf32> to vector<24x1xf32>
    %22 = arith.subf %14, %21 : vector<24x1xf32>
    %cst_9 = arith.constant 0.000000e+00 : f32
    %23 = vector.shape_cast %0 : vector<1x16xf32> to vector<1x16xf32>
    %24 = vector.broadcast %23 : vector<1x16xf32> to vector<24x16xf32>
    %25 = vector.broadcast %cst_9 : f32 to vector<24x16xf32>
    %26 = arith.select %17, %24, %25 : vector<24x16xi1>, vector<24x16xf32>
    %cst_10 = arith.constant dense<0.000000e+00> : vector<24xf32>
    %27 = vector.multi_reduction <add>, %26, %cst_10 [1] : vector<24x16xf32> to vector<24xf32>
    %28 = vector.shape_cast %27 : vector<24xf32> to vector<24x1xf32>
    %29 = arith.mulf %28, %22 : vector<24x1xf32>
    %cst_11 = arith.constant 0.000000e+00 : f32
    %30 = vector.broadcast %cst_11 : f32 to vector<24x1xf32>
    %31 = arith.subf %30, %29 : vector<24x1xf32>
    %32 = math.exp %31 : vector<24x1xf32>
    %cst_12 = arith.constant 1.000000e+00 : f32
    %33 = vector.broadcast %cst_12 : f32 to vector<24x1xf32>
    %34 = arith.subf %33, %32 : vector<24x1xf32>
    %35 = arith.mulf %34, %34 : vector<24x1xf32>
    %cst_13 = arith.constant 1.000000e+00 : f32
    %36 = vector.broadcast %cst_13 : f32 to vector<24x1xf32>
    %37 = arith.mulf %36, %35 : vector<24x1xf32>
    %38 = arith.mulf %37, %29 : vector<24x1xf32>
    %c0_14 = arith.constant 0 : index
    %c0_15 = arith.constant 0 : index
    %39 = vector.load %arg6[%c0_14, %c0_15] : memref<1x1xf32, #tpu.memory_space<vmem>>, vector<1x1xf32>
    %cst_16 = arith.constant dense<0.000000e+00> : vector<1xf32>
    %40 = vector.multi_reduction <add>, %38, %cst_16 [0] : vector<24x1xf32> to vector<1xf32>
    %41 = vector.shape_cast %40 : vector<1xf32> to vector<1x1xf32>
    %42 = arith.addf %39, %41 : vector<1x1xf32>
    %c0_17 = arith.constant 0 : index
    %c0_18 = arith.constant 0 : index
    %43 = vector.load %arg6[%c0_17, %c0_18] : memref<1x1xf32, #tpu.memory_space<vmem>>, vector<1x1xf32>
    tpu.vector_store %arg6[%c0_17, %c0_18], %42 {strides = array<i32>} : memref<1x1xf32, #tpu.memory_space<vmem>>, vector<1x1xf32>,
    %c0_i32_19 = arith.constant 0 : i32
    %44 = arith.cmpi eq, %arg1, %c0_i32_19 : i32
    %45 = arith.extui %44 : i1 to i32
    %c0_i32_20 = arith.constant 0 : i32
    %46 = arith.cmpi ne, %45, %c0_i32_20 : i32
    scf.if %46 {
      %c0_21 = arith.constant 0 : index
      %c0_22 = arith.constant 0 : index
      %47 = vector.load %arg6[%c0_21, %c0_22] : memref<1x1xf32, #tpu.memory_space<vmem>>, vector<1x1xf32>
      %cst_23 = arith.constant 0.0416666679 : f32
      %48 = vector.broadcast %cst_23 : f32 to vector<1x1xf32>
      %49 = arith.mulf %47, %48 : vector<1x1xf32>
      %50 = vector.shape_cast %49 : vector<1x1xf32> to vector<1x1xf32>
      %51 = vector.broadcast %50 : vector<1x1xf32> to vector<8x128xf32>
      %c0_24 = arith.constant 0 : index
      %c0_25 = arith.constant 0 : index
      %52 = vector.load %arg5[%c0_24, %c0_25] : memref<8x128xf32, #tpu.memory_space<vmem>>, vector<8x128xf32>
      tpu.vector_store %arg5[%c0_24, %c0_25], %51 {strides = array<i32>} : memref<8x128xf32, #tpu.memory_space<vmem>>, vector<8x128xf32>,
    } else {
    }
    return
  }
  func.func @transform_0(%arg0: i32, %arg1: i32) -> (i32, i32) {
    %c1_i32 = arith.constant 1 : i32
    %0 = arith.muli %arg0, %c1_i32 : i32
    %1 = arith.addi %0, %arg1 : i32
    %c0_i32 = arith.constant 0 : i32
    %c0_i32_0 = arith.constant 0 : i32
    return %1, %c0_i32 : i32, i32
  }
  func.func @transform_1(%arg0: i32, %arg1: i32) -> (i32, i32) {
    %c1_i32 = arith.constant 1 : i32
    %0 = arith.muli %arg0, %c1_i32 : i32
    %1 = arith.addi %0, %arg1 : i32
    %c0_i32 = arith.constant 0 : i32
    %c0_i32_0 = arith.constant 0 : i32
    return %1, %c0_i32 : i32, i32
  }
  func.func @transform_2(%arg0: i32, %arg1: i32) -> (i32, i32) {
    %c0_i32 = arith.constant 0 : i32
    %c0_i32_0 = arith.constant 0 : i32
    %c0_i32_1 = arith.constant 0 : i32
    return %c0_i32, %c0_i32_0 : i32, i32
  }
  func.func @transform_3(%arg0: i32, %arg1: i32) -> (i32, i32) {
    %c0_i32 = arith.constant 0 : i32
    %c0_i32_0 = arith.constant 0 : i32
    return %arg0, %c0_i32 : i32, i32
  }
}

</mosaic_0001>

<llo_original>
// kernel: tpu_custom_call.1
$region0: #{tpu_custom_call.1}
  #allocation0 [shape = 'u32[]', space=smem, size = 0x4, offset = 0x4, fixed_abs, tag = 'smem constant byte address 0x4 - core index']
  #allocation1 [shape = 'u32[144,128]{1,0:T(1,128)}', space=vmem, size = 0x12000, scoped, tag = 'internal scratch']
  #allocation2 [shape = 'f32[1,1]{1,0:T(1,128)}', space=vmem, size = 0x200, scoped, tag = 'scratch operand']
  %s0 = inlined_call_operand.vmem [shape: f32[24,16], index: 0, kind: input, shape index: {}]
  %s1 = inlined_call_operand.vmem [shape: s32[24,1], index: 1, kind: input, shape index: {}]
  %s2 = inlined_call_operand.vmem [shape: f32[1,16], index: 2, kind: input, shape index: {}]
  %s3 = inlined_call_operand.hbm [shape: f32[8,128], index: 3, kind: output, shape index: {}]
  %s4 = sld [smem:[#allocation0]]
  $region30: #{tpu_custom_call.1} parent=0
    _
  %s6 = ssub.s32 1, %s4
  %s7 = scalar_select 0, %s6, %s4
  $region1: #{tpu_custom_call.1} parent=0
    #allocation3 [shape = 'u8[4096]{0}', space=vmem, size = 0x1000, scoped, tag = 'output window, operand 0, single buffered']
    #allocation4 [shape = 's32[1]{0}', space=sflag, size = 0x4, scoped, tag = 'scoped memory for tpu_custom_call.1']
    %8 = vsyncpa [#allocation4], 0
    // Predicated region
    $region2: #{tpu_custom_call.1} parent=1 // pred_check
      _
    $region3: #{tpu_custom_call.1} parent=1 // pred_check_branch
      %10 = sbr.rel (0) target = $region5
    $region4: #{tpu_custom_call.1} parent=1 // pred_region
      %s11 = sadd.s32 0, 0
      %s12 = smul.u32 3, %s11
      %p13 = scmp.lt.s32.totalorder %s12, 2
      %s14 = scalar_select %p13, %s12, 2
      %s15 = smul.addr %s14, 8
      %s16 = scalar_lea.vmem %s0, %s15
      %s17 = sadd.s32 0, 0
      %s18 = smul.u32 3, %s17
    $region5: #{tpu_custom_call.1} parent=1 // pred_fallthru
      _
    // Predicated region
    $region6: #{tpu_custom_call.1} parent=1 // pred_check
      _
    $region7: #{tpu_custom_call.1} parent=1 // pred_check_branch
      %20 = sbr.rel (0) target = $region9
    $region8: #{tpu_custom_call.1} parent=1 // pred_region
      %s21 = sadd.s32 0, 0
      %s22 = smul.u32 3, %s21
      %p23 = scmp.lt.s32.totalorder %s22, 2
      %s24 = scalar_select %p23, %s22, 2
      %s25 = smul.addr %s24, 8
      %s26 = scalar_lea.vmem %s1, %s25
      %s27 = sadd.s32 0, 0
      %s28 = smul.u32 3, %s27
    $region9: #{tpu_custom_call.1} parent=1 // pred_fallthru
      _
    // Predicated region
    $region10: #{tpu_custom_call.1} parent=1 // pred_check
      _
    $region11: #{tpu_custom_call.1} parent=1 // pred_check_branch
      %30 = sbr.rel (0) target = $region13
    $region12: #{tpu_custom_call.1} parent=1 // pred_region
      _
    $region13: #{tpu_custom_call.1} parent=1 // pred_fallthru
      _
    %s31 = sadd.s32 0, 0
    %s32 = smul.u32 3, %s31
    %p33 = scmp.lt.s32.totalorder %s32, 2
    %s34 = scalar_select %p33, %s32, 2
    %s35 = smul.addr %s34, 8
    %s36 = scalar_lea.vmem %s0, %s35
    %s37 = sadd.s32 0, 0
    %s38 = smul.u32 3, %s37
    %p39 = scmp.lt.s32.totalorder %s38, 2
    %s40 = scalar_select %p39, %s38, 2
    %s41 = smul.addr %s40, 8
    %s42 = scalar_lea.vmem %s1, %s41
    %s43 = sadd.s32 0, 0
    %s44 = smul.u32 3, %s43
    %p45 = scmp.lt.s32.totalorder %s44, 2
    %s46 = scalar_select %p45, %s44, 2
    %s47 = smul.addr %s46, 8
    %s48 = scalar_lea.vmem %s0, %s47
    %s49 = sadd.s32 0, 0
    %s50 = smul.u32 3, %s49
    %s51 = sadd.s32 0, 0
    %s52 = smul.u32 3, %s51
    %p53 = scmp.lt.s32.totalorder %s52, 2
    %s54 = scalar_select %p53, %s52, 2
    %s55 = smul.addr %s54, 8
    %s56 = scalar_lea.vmem %s1, %s55
    %s57 = sadd.s32 0, 0
    %s58 = smul.u32 3, %s57
    %v59 = vld [vmem:[%s2] sm:$0x1]
    %p60 = scmp.eq.s32.totalorder 0, 0
    // Predicated region
    $region14: #{tpu_custom_call.1} parent=1 // pred_check
      %p61 = pneg %p60
    $region15: #{tpu_custom_call.1} parent=1 // pred_check_branch
      %63 = sbr.rel (%p61) target = $region17
    $region16: #{tpu_custom_call.1} parent=1 // pred_region
      %vm64 = vcmask 0
      %65 = vst.msk [vmem:[#allocation2] sm:$0x1] %vm64, 0.0
    $region17: #{tpu_custom_call.1} parent=1 // pred_fallthru
      _
    %v66 = vld [vmem:[%s48] sm:$0xff]
    %v67 = vld [vmem:[%s48 + $0x8] sm:$0xff]
    %v68 = vld [vmem:[%s48 + $0x10] sm:$0xff]
    %v69 = vld [vmem:[%s56] sm:$0xff]
    %v70 = vld [vmem:[%s56 + $0x8] sm:$0xff]
    %v71 = vld [vmem:[%s56 + $0x10] sm:$0xff]
    %vm72 = vcmask 130048
    %v73 = vsel %vm72, %v66, -inf
    %74 = vmax.xlane.f32.xlu0 %v73
    %v75 = vpop.xlane.xlu0 %74
    %v76 = vsel %vm72, %v67, -inf
    %77 = vmax.xlane.f32.xlu0 %v76
    %v78 = vpop.xlane.xlu0 %77
    %v79 = vsel %vm72, %v68, -inf
    %80 = vmax.xlane.f32.xlu0 %v79
    %v81 = vpop.xlane.xlu0 %80
    %v82 = vsub.f32 %v66, %v75
    %v83 = vsub.f32 %v67, %v78
    %v84 = vsub.f32 %v68, %v81
    %v85 = vmul.f32 %v82, 1.442695
    %v86 = vpow.pop %v85
    %v87 = vmul.f32 %v83, 1.442695
    %v88 = vpow.pop %v87
    %v89 = vmul.f32 %v84, 1.442695
    %v90 = vpow.pop %v89
    %v91 = vsel %vm72, %v86, 0.0
    %92 = vadd.xlane.f32.xlu0 %v91
    %v93 = vpop.xlane.xlu0 %92
    %v94 = vsel %vm72, %v88, 0.0
    %95 = vadd.xlane.f32.xlu0 %v94
    %v96 = vpop.xlane.xlu0 %95
    %v97 = vsel %vm72, %v90, 0.0
    %98 = vadd.xlane.f32.xlu0 %v97
    %v99 = vpop.xlane.xlu0 %98
    %v100 = vlog2.pop %v93
    %v101 = vmul.f32 %v100, 0.6931472
    %v102 = vlog2.pop %v96
    %v103 = vmul.f32 %v102, 0.6931472
    %v104 = vlog2.pop %v99
    %v105 = vmul.f32 %v104, 0.6931472
    %v106 = vadd.f32 %v75, %v101
    %v107 = vadd.f32 %v78, %v103
    %v108 = vadd.f32 %v81, %v105
    %v109 = vlaneseq
    %v110 = vand.u32 %v109, 127
    %111 = vset.pattern.permute.xlu0 0
    %112 = vperm.xlu0 %111, %v69
    %v113 = vpop.permute.xlu0 %112
    %114 = vset.pattern.permute.xlu0 0
    %115 = vperm.xlu0 %114, %v70
    %v116 = vpop.permute.xlu0 %115
    %117 = vset.pattern.permute.xlu0 0
    %118 = vperm.xlu0 %117, %v71
    %v119 = vpop.permute.xlu0 %118
    %vm120 = vcmp.eq.s32.totalorder %v110, %v113
    %vm121 = vcmp.eq.s32.totalorder %v110, %v116
    %vm122 = vcmp.eq.s32.totalorder %v110, %v119
    %v123 = vsel %vm120, %v66, 0.0
    %v124 = vsel %vm121, %v67, 0.0
    %v125 = vsel %vm122, %v68, 0.0
    %v126 = vsel %vm72, %v123, 0.0
    %127 = vadd.xlane.f32.xlu0 %v126
    %v128 = vpop.xlane.xlu0 %127
    %v129 = vsel %vm72, %v124, 0.0
    %130 = vadd.xlane.f32.xlu0 %v129
    %v131 = vpop.xlane.xlu0 %130
    %v132 = vsel %vm72, %v125, 0.0
    %133 = vadd.xlane.f32.xlu0 %v132
    %v134 = vpop.xlane.xlu0 %133
    %v135 = vsub.f32 %v106, %v128
    %v136 = vsub.f32 %v107, %v131
    %v137 = vsub.f32 %v108, %v134
    %v139 = vlaneseq
    %v140 = vshrl.u32 %v139, 7
    %v141 = vsub.s32 0, %v140
    %v142 = vrot.slane %v59, %v141
    %v144 = vsel %vm120, %v142, 0.0
    %v145 = vsel %vm121, %v142, 0.0
    %v146 = vsel %vm122, %v142, 0.0
    %v147 = vsel %vm72, %v144, 0.0
    %148 = vadd.xlane.f32.xlu0 %v147
    %v149 = vpop.xlane.xlu0 %148
    %v150 = vsel %vm72, %v145, 0.0
    %151 = vadd.xlane.f32.xlu0 %v150
    %v152 = vpop.xlane.xlu0 %151
    %v153 = vsel %vm72, %v146, 0.0
    %154 = vadd.xlane.f32.xlu0 %v153
    %v155 = vpop.xlane.xlu0 %154
    %v156 = vmul.f32 %v149, %v135
    %v157 = vmul.f32 %v152, %v136
    %v158 = vmul.f32 %v155, %v137
    %v159 = vsub.f32 0.0, %v156
    %v160 = vsub.f32 0.0, %v157
    %v161 = vsub.f32 0.0, %v158
    %v162 = vmul.f32 %v159, 1.442695
    %v163 = vpow.pop %v162
    %v164 = vmul.f32 %v160, 1.442695
    %v165 = vpow.pop %v164
    %v166 = vmul.f32 %v161, 1.442695
    %v167 = vpow.pop %v166
    %v168 = vsub.f32 1.0, %v163
    %v169 = vsub.f32 1.0, %v165
    %v170 = vsub.f32 1.0, %v167
    %v171 = vmul.f32 %v168, %v168
    %v172 = vmul.f32 %v169, %v169
    %v173 = vmul.f32 %v170, %v170
    %v174 = vmul.f32 %v171, %v156
    %v175 = vmul.f32 %v172, %v157
    %v176 = vmul.f32 %v173, %v158
    %v177 = vld [vmem:[#allocation2] sm:$0x1]
    %v178 = vadd.f32 %v174, %v175
    %v179 = vadd.f32 %v178, %v176
    %v180 = vrot.slane %v179, 4
    %v181 = vadd.f32 %v179, %v180
    %v182 = vrot.slane %v181, 2
    %v183 = vadd.f32 %v181, %v182
    %v184 = vrot.slane %v183, 1
    %v185 = vadd.f32 %v183, %v184
    %v186 = vadd.f32 %v177, %v185
    %vm187 = vcmask 0
    %188 = vst.msk [vmem:[#allocation2] sm:$0x1] %vm187, %v186
    // Predicated region
    $region18: #{tpu_custom_call.1} parent=1 // pred_check
      %p189 = pneg %p60
    $region19: #{tpu_custom_call.1} parent=1 // pred_check_branch
      %191 = sbr.rel (%p189) target = $region21
    $region20: #{tpu_custom_call.1} parent=1 // pred_region
      %v192 = vld [vmem:[#allocation2] sm:$0x1]
      %v193 = vmul.f32 %v192, 0.041666668
      %v195 = vlaneseq
      %v196 = vshrl.u32 %v195, 7
      %v197 = vsub.s32 0, %v196
      %v198 = vrot.slane %v193, %v197
      %199 = vset.pattern.permute.xlu0 0
      %200 = vperm.xlu0 %199, %v198
      %v201 = vpop.permute.xlu0 %200
      %203 = vst [vmem:[#allocation3] sm:$0xff] %v201
    $region21: #{tpu_custom_call.1} parent=1 // pred_fallthru
      _
    // Predicated region
    $region22: #{tpu_custom_call.1} parent=1 // pred_check
      _
    $region23: #{tpu_custom_call.1} parent=1 // pred_check_branch
      %205 = sbr.rel (0) target = $region25
    $region24: #{tpu_custom_call.1} parent=1 // pred_region
      %s207 = ssub.s32 128, 128
      %208 = vsyncadd [#allocation4], %s207
      %s210 = sshll.u32 [#allocation3], 4
      %s211 = int_to_ptr.vmem [resolvable:$true] %s210
      %213 = dma.vmem_to_hbm [thread:$0]  %s211, 128, %s3, [#allocation4]
    $region25: #{tpu_custom_call.1} parent=1 // pred_fallthru
      _
    // Predicated region
    $region26: #{tpu_custom_call.1} parent=1 // pred_check
      _
    $region27: #{tpu_custom_call.1} parent=1 // pred_check_branch
      %215 = sbr.rel (0) target = $region29
    $region28: #{tpu_custom_call.1} parent=1 // pred_region
      %216 = dma.done [#allocation4], 128
    $region29: #{tpu_custom_call.1} parent=1 // pred_fallthru
      _
    %217 = vsyncpa [#allocation4], 1

</llo_original>
